<compile_context>
chip_gen: v7x
topology: tpu7x:2x2x1
jax: 0.10.0
libtpu: 0.0.40
codegen_flags: <defaults>
</compile_context>

<pallas_src>
import functools

import jax
import jax.numpy as jnp
from jax.experimental import pallas as pl
from jax.experimental.pallas import tpu as pltpu


def _cdiv(a, b):
    return -(-a // b)


def _round_up(x, m):
    return _cdiv(x, m) * m


def _vmem_capacity_bytes():
    try:
        return int(pltpu.get_tpu_info().vmem_capacity_bytes)
    except Exception:
        return 64 * 1024 * 1024  # conservative (v7x per-TC VMEM)


# ---------------------------------------------------------------------------
# Kernel bodies
# ---------------------------------------------------------------------------

def _convT_kernel_interleaved(x_ref, w_ref, b_ref, o_ref):
    """Residue-interleaved layout: o[0, r*C_out+co, q] = y[co, q*stride + r].

    x_ref: (1, n_m*C_in, tT)   shifted inputs concatenated on contraction axis
    w_ref: (stride*C_out, n_m*C_in)   fused weights (resident)
    b_ref: (stride*C_out, 1)          bias (f32)
    o_ref: (1, stride*C_out, tT)      lane-dense on input time q
    """
    acc = jnp.dot(w_ref[...], x_ref[0], preferred_element_type=jnp.float32)
    o_ref[0] = (acc + b_ref[...]).astype(o_ref.dtype)


def _convT_kernel_deinterleaved(x_ref, w_ref, b_ref, o_ref, *, c_out, stride):
    """Final NCW layout: o[0, co, q*stride + r] = y[co, q*stride + r].

    Same operands as above, but the output block is (1, C_out, tT*stride) and
    each residue r is scattered into lanes r, r+stride, ... with a strided
    lane store (VPU/XLU slack; the HBM DMA of the block stays dense).
    """
    t_tile = x_ref.shape[-1]
    acc = jnp.dot(w_ref[...], x_ref[0], preferred_element_type=jnp.float32)
    acc = acc + b_ref[...]
    for r in range(stride):  # static, tiny, unrolled
        rows = acc[r * c_out:(r + 1) * c_out, :]
        o_ref[0, :, pl.ds(r, t_tile, stride=stride)] = rows.astype(o_ref.dtype)


# ---------------------------------------------------------------------------
# One-time probe: do lane-strided stores lower (and compute correctly) here?
# ---------------------------------------------------------------------------

_STRIDED_LANE_STORE_OK = {}


def _strided_lane_store_supported(stride, out_dtype):
    key = (int(stride), jnp.dtype(out_dtype).name)
    if key in _STRIDED_LANE_STORE_OK:
        return _STRIDED_LANE_STORE_OK[key]
    ok = False
    try:
        rows, cols = 8, 128

        def probe_kernel(x_ref, o_ref):
            for r in range(stride):
                o_ref[:, pl.ds(r, cols, stride=stride)] = (
                    x_ref[...] + jnp.asarray(float(r), o_ref.dtype))

        # Small integer values -> exactly representable in bf16 as well.
        xv = (jnp.arange(rows * cols, dtype=jnp.float32) % 31.0).reshape(
            rows, cols).astype(out_dtype)
        out = pl.pallas_call(
            probe_kernel,
            out_shape=jax.ShapeDtypeStruct((rows, cols * stride), out_dtype),
        )(xv)
        out = jax.block_until_ready(out)
        expected = (xv.astype(jnp.float32)[:, :, None]
                    + jnp.arange(stride, dtype=jnp.float32)[None, None, :]
                    ).reshape(rows, cols * stride)
        ok = bool(jnp.array_equal(out.astype(jnp.float32), expected))
    except Exception:
        ok = False
    _STRIDED_LANE_STORE_OK[key] = ok
    return ok


# ---------------------------------------------------------------------------
# Wrapper
# ---------------------------------------------------------------------------

def causal_conv_transpose1d(x, weight, bias, stride, *,
                            out_dtype=None,
                            compute_dtype=jnp.bfloat16,
                            time_tile=None,
                            deinterleave_in_kernel="auto",
                            interleaved_output=False,
                            vmem_block_budget_bytes=8 * 1024 * 1024):
    """Causal ConvTranspose1d.

    x:      (B, C_in, T)            weight: (C_in, C_out, K)  [PyTorch layout]
    bias:   (C_out,)                returns (B, C_out, min((T-1)*stride+K, T*stride))

    out_dtype:  output dtype (default: x.dtype).  bf16 recommended for perf.
    interleaved_output: if True, return the kernel's raw residue-interleaved
        layout (B, stride, C_out, T) with y[b, co, q*stride+r] == out[b, r, co, q]
        so a downstream consumer can fuse the de-interleave.
    """
    B, C_in, T = x.shape
    assert weight.shape[0] == C_in
    _, C_out, K = weight.shape
    stride = int(stride)
    out_dtype = jnp.dtype(x.dtype if out_dtype is None else out_dtype)
    compute_dtype = jnp.dtype(compute_dtype)

    n_m = _cdiv(K, stride)          # number of distinct input shifts
    halo = n_m - 1
    K_pad = n_m * stride
    CK = n_m * C_in                 # fused contraction size
    rows = stride * C_out           # fused output rows, residue-major
    L_out = min((T - 1) * stride + K, T * stride)   # PyTorch length + causal trim

    # ---- time tiling (lane axis) -------------------------------------------
    per_q_bytes = 2 * (CK * compute_dtype.itemsize + rows * out_dtype.itemsize)
    if time_tile is None:
        if T <= 256:
            time_tile = T                       # single exact block, no padding
        else:
            time_tile = (vmem_block_budget_bytes // max(per_q_bytes, 1)) // 128 * 128
            time_tile = max(128, min(2048, time_tile))
            time_tile = min(time_tile, _round_up(T, 128))
    if time_tile != T:
        assert time_tile % 128 == 0, "time_tile must be a multiple of 128 (or == T)"
    n_t = _cdiv(T, time_tile)
    T_pad = n_t * time_tile

    # ---- operands ------------------------------------------------------------
    # x_cat[b, m*C_in + ci, q] = x[b, ci, q - m]   (0 outside [0, T))
    xc = x.astype(compute_dtype)
    x_p = jnp.pad(xc, ((0, 0), (0, 0), (halo, T_pad - T)))
    x_cat = jnp.concatenate(
        [x_p[:, :, halo - m: halo - m + T_pad] for m in range(n_m)], axis=1)

    # wg[r*C_out + co, m*C_in + ci] = W[ci, co, m*stride + r]   (zero for taps >= K)
    wc = weight.astype(compute_dtype)
    w_pad = jnp.pad(wc, ((0, 0), (0, 0), (0, K_pad - K)))
    wg = jnp.transpose(w_pad.reshape(C_in, C_out, n_m, stride), (3, 1, 2, 0))
    wg = wg.reshape(rows, CK)

    bias_full = jnp.tile(bias.astype(jnp.float32), stride).reshape(rows, 1)

    # ---- specs / compiler params --------------------------------------------
    in_specs = [
        pl.BlockSpec((1, CK, time_tile), lambda t, b: (b, 0, t)),
        pl.BlockSpec((rows, CK), lambda t, b: (0, 0)),
        pl.BlockSpec((rows, 1), lambda t, b: (0, 0)),
    ]
    grid = (n_t, B)   # big (time) axis first so the megacore split lands on it

    blk_bytes = (CK * time_tile * compute_dtype.itemsize
                 + rows * time_tile * out_dtype.itemsize
                 + rows * CK * compute_dtype.itemsize
                 + rows * 4)
    vmem_cap = _vmem_capacity_bytes()
    vmem_limit = int(min(vmem_cap // 2,
                         max(8 * 1024 * 1024, 4 * blk_bytes + (2 << 20))))
    cparams = pltpu.CompilerParams(
        dimension_semantics=("parallel", "parallel"),
        vmem_limit_bytes=vmem_limit,
    )
    args = (x_cat, wg, bias_full)

    if interleaved_output:
        out_k = pl.pallas_call(
            _convT_kernel_interleaved,
            out_shape=jax.ShapeDtypeStruct((B, rows, T), out_dtype),
            grid=grid, in_specs=in_specs,
            out_specs=pl.BlockSpec((1, rows, time_tile), lambda t, b: (b, 0, t)),
            compiler_params=cparams,
        )(*args)
        return out_k.reshape(B, stride, C_out, T)

    use_deint = deinterleave_in_kernel
    if use_deint == "auto":
        use_deint = stride > 1 and _strided_lane_store_supported(stride, out_dtype)

    if use_deint:
        try:
            return pl.pallas_call(
                functools.partial(_convT_kernel_deinterleaved,
                                  c_out=C_out, stride=stride),
                out_shape=jax.ShapeDtypeStruct((B, C_out, L_out), out_dtype),
                grid=grid, in_specs=in_specs,
                out_specs=pl.BlockSpec((1, C_out, time_tile * stride),
                                       lambda t, b: (b, 0, t)),
                compiler_params=cparams,
            )(*args)
        except Exception:
            if deinterleave_in_kernel is True:
                raise
            # fall through to the interleaved + XLA de-interleave path

    # Fallback: residue-interleaved kernel output, one XLA de-interleave pass.
    out_k = pl.pallas_call(
        _convT_kernel_interleaved,
        out_shape=jax.ShapeDtypeStruct((B, rows, T), out_dtype),
        grid=grid, in_specs=in_specs,
        out_specs=pl.BlockSpec((1, rows, time_tile), lambda t, b: (b, 0, t)),
        compiler_params=cparams,
    )(*args)
    y = out_k.reshape(B, stride, C_out, T)
    y = jnp.transpose(y, (0, 2, 3, 1)).reshape(B, C_out, T * stride)
    if L_out != T * stride:
        y = y[:, :, :L_out]
    return y


# ---------------------------------------------------------------------------
# Plain-JAX reference (matches PyTorch ConvTranspose1d + causal slice)
# ---------------------------------------------------------------------------

def _reference_causal_conv_transpose1d(x, weight, bias, stride):
    B, C_in, T = x.shape
    _, C_out, K = weight.shape
    L_full = (T - 1) * stride + K
    out = jnp.zeros((B, C_out, L_full), jnp.float32)
    for k in range(K):
        contrib = jnp.einsum("bct,cd->bdt", x, weight[:, :, k],
                             precision=jax.lax.Precision.HIGHEST)
        out = out.at[:, :, k: k + (T - 1) * stride + 1: stride].add(contrib)
    out = out + bias[None, :, None]
    return out[:, :, : min(L_full, T * stride)]


if __name__ == "__main__":
    # Small config consistent with CausalConvTranspose1d.__init__
    chan_in, chan_out = 4, 6
    kernel_size, stride = 7, 4
    B, T = 2, 16

    key = jax.random.PRNGKey(0)
    kx, kw, kb = jax.random.split(key, 3)
    x = jax.random.normal(kx, (B, chan_in, T), dtype=jnp.float32)
    weight = 0.1 * jax.random.normal(
        kw, (chan_in, chan_out, kernel_size), dtype=jnp.float32)
    bias = 0.1 * jax.random.normal(kb, (chan_out,), dtype=jnp.float32)

    # Reference uses the same bf16 operand rounding as the kernel (products are
    # exact in f32, accumulation in f32), so the f32-output tolerance stays tight.
    xq = x.astype(jnp.bfloat16).astype(jnp.float32)
    wq = weight.astype(jnp.bfloat16).astype(jnp.float32)
    ref = _reference_causal_conv_transpose1d(xq, wq, bias, stride)

    # 1) f32 output (PyTorch-dtype semantics).
    out_f32 = jax.block_until_ready(
        causal_conv_transpose1d(x, weight, bias, stride, out_dtype=jnp.float32))
    assert out_f32.shape == ref.shape, (out_f32.shape, ref.shape)
    assert jnp.allclose(out_f32, ref, atol=1e-4, rtol=1e-4), float(
        jnp.max(jnp.abs(out_f32 - ref)))

    # 2) bf16 output (recommended perf configuration: halves output HBM traffic).
    out_bf16 = jax.block_until_ready(
        causal_conv_transpose1d(x, weight, bias, stride, out_dtype=jnp.bfloat16))
    assert out_bf16.shape == ref.shape, (out_bf16.shape, ref.shape)
    assert jnp.allclose(out_bf16.astype(jnp.float32), ref,
                        atol=3e-2, rtol=3e-2), float(
        jnp.max(jnp.abs(out_bf16.astype(jnp.float32) - ref)))

    print("KERNEL_OK")
</pallas_src>

<mosaic_0001>
module attributes {stable_mosaic.version = 11 : i64} {
  func.func @probe_kernel(%arg0: memref<8x128xf32, #tpu.memory_space<vmem>>, %arg1: memref<8x512xf32, #tpu.memory_space<vmem>>) attributes {dimension_semantics = [], scalar_prefetch = 0 : i64, scratch_operands = 0 : i64, tpu.core_type = #tpu.core_type<tc>} {
    %c0 = arith.constant 0 : index
    %c0_0 = arith.constant 0 : index
    %0 = vector.load %arg0[%c0, %c0_0] : memref<8x128xf32, #tpu.memory_space<vmem>>, vector<8x128xf32>
    %cst = arith.constant 0.000000e+00 : f32
    %1 = vector.broadcast %cst : f32 to vector<8x128xf32>
    %2 = arith.addf %0, %1 : vector<8x128xf32>
    %c0_1 = arith.constant 0 : index
    %c0_2 = arith.constant 0 : index
    %3 = tpu.strided_load %arg1[%c0_1, %c0_2] {strides = array<i32: 1, 4>} : memref<8x512xf32, #tpu.memory_space<vmem>>, vector<8x128xf32>
    tpu.strided_store %arg1[%c0_1, %c0_2], %2 {strides = array<i32: 1, 4>} : memref<8x512xf32, #tpu.memory_space<vmem>>, vector<8x128xf32>
    %c0_3 = arith.constant 0 : index
    %c0_4 = arith.constant 0 : index
    %4 = vector.load %arg0[%c0_3, %c0_4] : memref<8x128xf32, #tpu.memory_space<vmem>>, vector<8x128xf32>
    %cst_5 = arith.constant 1.000000e+00 : f32
    %5 = vector.broadcast %cst_5 : f32 to vector<8x128xf32>
    %6 = arith.addf %4, %5 : vector<8x128xf32>
    %c0_6 = arith.constant 0 : index
    %c1 = arith.constant 1 : index
    %7 = tpu.strided_load %arg1[%c0_6, %c1] {strides = array<i32: 1, 4>} : memref<8x512xf32, #tpu.memory_space<vmem>>, vector<8x128xf32>
    tpu.strided_store %arg1[%c0_6, %c1], %6 {strides = array<i32: 1, 4>} : memref<8x512xf32, #tpu.memory_space<vmem>>, vector<8x128xf32>
    %c0_7 = arith.constant 0 : index
    %c0_8 = arith.constant 0 : index
    %8 = vector.load %arg0[%c0_7, %c0_8] : memref<8x128xf32, #tpu.memory_space<vmem>>, vector<8x128xf32>
    %cst_9 = arith.constant 2.000000e+00 : f32
    %9 = vector.broadcast %cst_9 : f32 to vector<8x128xf32>
    %10 = arith.addf %8, %9 : vector<8x128xf32>
    %c0_10 = arith.constant 0 : index
    %c2 = arith.constant 2 : index
    %11 = tpu.strided_load %arg1[%c0_10, %c2] {strides = array<i32: 1, 4>} : memref<8x512xf32, #tpu.memory_space<vmem>>, vector<8x128xf32>
    tpu.strided_store %arg1[%c0_10, %c2], %10 {strides = array<i32: 1, 4>} : memref<8x512xf32, #tpu.memory_space<vmem>>, vector<8x128xf32>
    %c0_11 = arith.constant 0 : index
    %c0_12 = arith.constant 0 : index
    %12 = vector.load %arg0[%c0_11, %c0_12] : memref<8x128xf32, #tpu.memory_space<vmem>>, vector<8x128xf32>
    %cst_13 = arith.constant 3.000000e+00 : f32
    %13 = vector.broadcast %cst_13 : f32 to vector<8x128xf32>
    %14 = arith.addf %12, %13 : vector<8x128xf32>
    %c0_14 = arith.constant 0 : index
    %c3 = arith.constant 3 : index
    %15 = tpu.strided_load %arg1[%c0_14, %c3] {strides = array<i32: 1, 4>} : memref<8x512xf32, #tpu.memory_space<vmem>>, vector<8x128xf32>
    tpu.strided_store %arg1[%c0_14, %c3], %14 {strides = array<i32: 1, 4>} : memref<8x512xf32, #tpu.memory_space<vmem>>, vector<8x128xf32>
    return
  }
}

module attributes {stable_mosaic.version = 11 : i64} {
  func.func @_convT_kernel_interleaved(%arg0: i32, %arg1: i32, %arg2: memref<1x8x16xbf16, #tpu.memory_space<vmem>>, %arg3: memref<24x8xbf16, #tpu.memory_space<vmem>>, %arg4: memref<24x1xf32, #tpu.memory_space<vmem>>, %arg5: memref<1x24x16xf32, #tpu.memory_space<vmem>>) attributes {dimension_semantics = [#tpu.dimension_semantics<parallel>, #tpu.dimension_semantics<parallel>], iteration_bounds = array<i64: 1, 2>, scalar_prefetch = 0 : i64, scratch_operands = 0 : i64, tpu.core_type = #tpu.core_type<tc>, window_params = [{transform_indices = @transform_0, window_bounds = array<i64: 1, 8, 16>}, {pipeline_mode = #tpu.pipeline_mode<synchronous>, transform_indices = @transform_1, window_bounds = array<i64: 24, 8>}, {pipeline_mode = #tpu.pipeline_mode<synchronous>, transform_indices = @transform_2, window_bounds = array<i64: 24, 1>}, {transform_indices = @transform_3, window_bounds = array<i64: 1, 24, 16>}]} {
    %c0 = arith.constant 0 : index
    %c0_0 = arith.constant 0 : index
    %0 = vector.load %arg3[%c0, %c0_0] : memref<24x8xbf16, #tpu.memory_space<vmem>>, vector<24x8xbf16>
    %c0_1 = arith.constant 0 : index
    %c0_2 = arith.constant 0 : index
    %c0_3 = arith.constant 0 : index
    %1 = vector.load %arg2[%c0_1, %c0_2, %c0_3] : memref<1x8x16xbf16, #tpu.memory_space<vmem>>, vector<1x8x16xbf16>
    %2 = vector.shape_cast %1 : vector<1x8x16xbf16> to vector<8x16xbf16>
    %cst = arith.constant dense<0.000000e+00> : vector<24x16xf32>
    %3 = tpu.matmul %0, %2, %cst {dimension_numbers = #tpu.dot_dimension_numbers<[1], [0], [0], [1], [0, 0, 1, 1], [], []>} : vector<24x8xbf16>, vector<8x16xbf16>, vector<24x16xf32> -> vector<24x16xf32>
    %c0_4 = arith.constant 0 : index
    %c0_5 = arith.constant 0 : index
    %4 = vector.load %arg4[%c0_4, %c0_5] : memref<24x1xf32, #tpu.memory_space<vmem>>, vector<24x1xf32>
    %5 = vector.broadcast %4 : vector<24x1xf32> to vector<24x16xf32>
    %6 = arith.addf %3, %5 : vector<24x16xf32>
    %c0_6 = arith.constant 0 : index
    %c0_7 = arith.constant 0 : index
    %c0_8 = arith.constant 0 : index
    %7 = vector.load %arg5[%c0_6, %c0_7, %c0_8] : memref<1x24x16xf32, #tpu.memory_space<vmem>>, vector<1x24x16xf32>
    %8 = vector.shape_cast %7 : vector<1x24x16xf32> to vector<24x16xf32>
    %9 = vector.shape_cast %6 : vector<24x16xf32> to vector<1x24x16xf32>
    tpu.vector_store %arg5[%c0_6, %c0_7, %c0_8], %9 {strides = array<i32>} : memref<1x24x16xf32, #tpu.memory_space<vmem>>, vector<1x24x16xf32>,
    return
  }
  func.func @transform_0(%arg0: i32, %arg1: i32) -> (i32, i32, i32) {
    %c0_i32 = arith.constant 0 : i32
    %c0_i32_0 = arith.constant 0 : i32
    return %arg1, %c0_i32, %arg0 : i32, i32, i32
  }
  func.func @transform_1(%arg0: i32, %arg1: i32) -> (i32, i32) {
    %c0_i32 = arith.constant 0 : i32
    %c0_i32_0 = arith.constant 0 : i32
    %c0_i32_1 = arith.constant 0 : i32
    return %c0_i32, %c0_i32_0 : i32, i32
  }
  func.func @transform_2(%arg0: i32, %arg1: i32) -> (i32, i32) {
    %c0_i32 = arith.constant 0 : i32
    %c0_i32_0 = arith.constant 0 : i32
    %c0_i32_1 = arith.constant 0 : i32
    return %c0_i32, %c0_i32_0 : i32, i32
  }
  func.func @transform_3(%arg0: i32, %arg1: i32) -> (i32, i32, i32) {
    %c0_i32 = arith.constant 0 : i32
    %c0_i32_0 = arith.constant 0 : i32
    return %arg1, %c0_i32, %arg0 : i32, i32, i32
  }
}

</mosaic_0001>

<llo_original>
// kernel: tpu_custom_call.1
$region0: #{tpu_custom_call.1}
  #allocation0 [shape = 'u32[]', space=smem, size = 0x4, offset = 0x4, fixed_abs, tag = 'smem constant byte address 0x4 - core index']
  #allocation1 [shape = 'u32[144,128]{1,0:T(1,128)}', space=vmem, size = 0x12000, scoped, tag = 'internal scratch']
  %s0 = inlined_call_operand.vmem [shape: bf16[2,8,16], index: 0, kind: input, shape index: {}]
  %s1 = inlined_call_operand.vmem [shape: bf16[24,8], index: 1, kind: input, shape index: {}]
  %s2 = inlined_call_operand.vmem [shape: f32[24,1], index: 2, kind: input, shape index: {}]
  %s3 = inlined_call_operand.vmem [shape: f32[2,24,16], index: 3, kind: output, shape index: {}]
  %s4 = sld [smem:[#allocation0]]
  $region45: #{tpu_custom_call.1} parent=0
    _
  %s6 = ssub.s32 1, %s4
  %s7 = scalar_select 0, %s6, %s4
  loop: start=0, step=1, limit=4
  $region2: #{tpu_custom_call.1} parent=0 // loop_pre_header
    _
  $region3: #{tpu_custom_call.1} parent=0 // loop_header
    %s9 = sphi 0, %s13
    %p10 = scmp.ge.s32.totalorder %s9, 4
    %s16 = sphi 0, %s28
    %s17 = sphi 0, %s24
    %s18 = sphi 0, %s16
    %s19 = sphi 0, %s17
    %s20 = sphi 0, %s18
    %s21 = sphi 0, %s19
    %s33 = sphi 0, %s35
    %s36 = sphi 0, %s33
    %s37 = sphi 0, %s36
    %s53 = sphi 0, %s37
    %s57 = sphi 0, %s57
    %s59 = sphi 0, %s57
    %s60 = sphi 0, %s59
    %s74 = sphi 0, %s60
    %s78 = sphi 0, %s78
    %s80 = sphi 0, %s78
    %s81 = sphi 0, %s80
    %s95 = sphi 0, %s81
    %s103 = sphi 0, %s105
    %s106 = sphi 0, %s103
    %s107 = sphi 0, %s106
    %s123 = sphi 0, %s107
  $region4: #{tpu_custom_call.1} parent=0 // loop_header_branch
    %12 = sbr.rel (%p10) target = $region8
  $region5: #{tpu_custom_call.1} parent=0 // loop_body
    %s14 = ssub.s32 %s9, 1
    %s15 = ssub.s32 %s9, 2
    %s22 = sadd.s32 1, %s17
    %p23 = scmp.ge.s32.totalorder %s22, 2
    %s24 = scalar_select %p23, 0, %s22
    %s25 = sadd.s32 1, %s16
    %s26 = scalar_select %p23, %s25, %s16
    %p27 = scmp.ge.s32.totalorder %s26, 1
    %s28 = scalar_select %p27, 0, %s26
    %s29 = ssub.s32 %s17, %s24
    %s30 = ssub.s32 %s16, %s28
    %s31 = sor.u32 %s29, %s30
    %p32 = scmp.eq.s32.totalorder %s31, 0
    %s34 = sadd.s32 %s33, 1
    %s35 = scalar_select %p32, %s33, %s34
    %p38 = pneg %p32
    %p39 = scmp.eq.s32.totalorder %s9, 1
    %p40 = por %p38, %p39
    %p41 = scmp.ne.s32.totalorder %s33, %s36
    %p42 = scmp.eq.s32.totalorder %s9, 0
    %p43 = por %p41, %p42
    %p44 = scmp.ne.s32.totalorder %s33, %s36
    %p45 = scmp.eq.s32.totalorder %s14, 1
    %p46 = por %p44, %p45
    %p47 = scmp.ne.s32.totalorder %s36, %s37
    %p48 = scmp.eq.s32.totalorder %s14, 0
    %p49 = por %p47, %p48
    %p50 = scmp.ne.s32.totalorder %s36, %s37
    %p51 = scmp.eq.s32.totalorder %s15, 1
    %p52 = por %p50, %p51
    %p54 = scmp.ne.s32.totalorder %s37, %s53
    %p55 = scmp.eq.s32.totalorder %s15, 0
    %p56 = por %p54, %p55
    %s58 = sadd.s32 %s57, 1
    %p61 = scmp.eq.s32.totalorder %s9, 1
    %p62 = scmp.ne.s32.totalorder %s57, %s59
    %p63 = scmp.eq.s32.totalorder %s9, 0
    %p64 = por %p62, %p63
    %p65 = scmp.ne.s32.totalorder %s57, %s59
    %p66 = scmp.eq.s32.totalorder %s14, 1
    %p67 = por %p65, %p66
    %p68 = scmp.ne.s32.totalorder %s59, %s60
    %p69 = scmp.eq.s32.totalorder %s14, 0
    %p70 = por %p68, %p69
    %p71 = scmp.ne.s32.totalorder %s59, %s60
    %p72 = scmp.eq.s32.totalorder %s15, 1
    %p73 = por %p71, %p72
    %p75 = scmp.ne.s32.totalorder %s60, %s74
    %p76 = scmp.eq.s32.totalorder %s15, 0
    %p77 = por %p75, %p76
    %s79 = sadd.s32 %s78, 1
    %p82 = scmp.eq.s32.totalorder %s9, 1
    %p83 = scmp.ne.s32.totalorder %s78, %s80
    %p84 = scmp.eq.s32.totalorder %s9, 0
    %p85 = por %p83, %p84
    %p86 = scmp.ne.s32.totalorder %s78, %s80
    %p87 = scmp.eq.s32.totalorder %s14, 1
    %p88 = por %p86, %p87
    %p89 = scmp.ne.s32.totalorder %s80, %s81
    %p90 = scmp.eq.s32.totalorder %s14, 0
    %p91 = por %p89, %p90
    %p92 = scmp.ne.s32.totalorder %s80, %s81
    %p93 = scmp.eq.s32.totalorder %s15, 1
    %p94 = por %p92, %p93
    %p96 = scmp.ne.s32.totalorder %s81, %s95
    %p97 = scmp.eq.s32.totalorder %s15, 0
    %p98 = por %p96, %p97
    %s99 = ssub.s32 %s17, %s24
    %s100 = ssub.s32 %s16, %s28
    %s101 = sor.u32 %s99, %s100
    %p102 = scmp.eq.s32.totalorder %s101, 0
    %s104 = sadd.s32 %s103, 1
    %s105 = scalar_select %p102, %s103, %s104
    %p108 = pneg %p102
    %p109 = scmp.eq.s32.totalorder %s9, 1
    %p110 = por %p108, %p109
    %p111 = scmp.ne.s32.totalorder %s103, %s106
    %p112 = scmp.eq.s32.totalorder %s9, 0
    %p113 = por %p111, %p112
    %p114 = scmp.ne.s32.totalorder %s103, %s106
    %p115 = scmp.eq.s32.totalorder %s14, 1
    %p116 = por %p114, %p115
    %p117 = scmp.ne.s32.totalorder %s106, %s107
    %p118 = scmp.eq.s32.totalorder %s14, 0
    %p119 = por %p117, %p118
    %p120 = scmp.ne.s32.totalorder %s106, %s107
    %p121 = scmp.eq.s32.totalorder %s15, 1
    %p122 = por %p120, %p121
    %p124 = scmp.ne.s32.totalorder %s107, %s123
    %p125 = scmp.eq.s32.totalorder %s15, 0
    %p126 = por %p124, %p125
    %p127 = scmp.le.s32.totalorder 1, %s9
    %p128 = scmp.lt.s32.totalorder %s9, 3
    %p129 = pnand %p127, %p128
    %p130 = pneg %p129
    // Predicated region
    $region9: #{tpu_custom_call.1} parent=5 // pred_check
      _
    $region10: #{tpu_custom_call.1} parent=5 // pred_check_branch
      %132 = sbr.rel (%p129) target = $region12
    $region11: #{tpu_custom_call.1} parent=5 // pred_region
      %s133 = ssub.s32 %s9, 1
      // Predicated region
      $region13: #{tpu_custom_call.1} parent=11 // pred_check
        %p134 = pneg %p70
      $region14: #{tpu_custom_call.1} parent=11 // pred_check_branch
        %136 = sbr.rel (%p134) target = $region16
      $region15: #{tpu_custom_call.1} parent=11 // pred_region
        _
      $region16: #{tpu_custom_call.1} parent=11 // pred_fallthru
        _
      // Predicated region
      $region17: #{tpu_custom_call.1} parent=11 // pred_check
        %p137 = pneg %p91
      $region18: #{tpu_custom_call.1} parent=11 // pred_check_branch
        %139 = sbr.rel (%p137) target = $region20
      $region19: #{tpu_custom_call.1} parent=11 // pred_region
        _
      $region20: #{tpu_custom_call.1} parent=11 // pred_fallthru
        _
    $region12: #{tpu_custom_call.1} parent=5 // pred_fallthru
      _
    %p140 = scmp.lt.s32.totalorder %s9, 2
    // Predicated region
    $region21: #{tpu_custom_call.1} parent=5 // pred_check
      %p141 = pneg %p140
    $region22: #{tpu_custom_call.1} parent=5 // pred_check_branch
      %143 = sbr.rel (%p141) target = $region24
    $region23: #{tpu_custom_call.1} parent=5 // pred_region
      // Predicated region
      $region25: #{tpu_custom_call.1} parent=23 // pred_check
        %p144 = pneg %p43
      $region26: #{tpu_custom_call.1} parent=23 // pred_check_branch
        %146 = sbr.rel (%p144) target = $region28
      $region27: #{tpu_custom_call.1} parent=23 // pred_region
        %p147 = scmp.lt.s32.totalorder %s17, 1
        %s148 = scalar_select %p147, %s17, 1
        %p149 = scmp.lt.s32.totalorder %s16, 0
        %s150 = scalar_select %p149, %s16, 0
        %s151 = sadd.s32 %s150, %s148
        %s152 = smul.addr %s151, 4
        %s153 = scalar_lea.vmem %s0, %s152
      $region28: #{tpu_custom_call.1} parent=23 // pred_fallthru
        _
    $region24: #{tpu_custom_call.1} parent=5 // pred_fallthru
      _
    %p154 = scmp.le.s32.totalorder 1, %s9
    %p155 = scmp.lt.s32.totalorder %s9, 3
    %p156 = pnand %p154, %p155
    %p157 = pneg %p156
    // Predicated region
    $region29: #{tpu_custom_call.1} parent=5 // pred_check
      _
    $region30: #{tpu_custom_call.1} parent=5 // pred_check_branch
      %159 = sbr.rel (%p156) target = $region32
    $region31: #{tpu_custom_call.1} parent=5 // pred_region
      %s160 = ssub.s32 %s9, 1
      %p161 = scmp.lt.s32.totalorder %s19, 1
      %s162 = scalar_select %p161, %s19, 1
      %p163 = scmp.lt.s32.totalorder %s18, 0
      %s164 = scalar_select %p163, %s18, 0
      %s165 = sadd.s32 %s164, %s162
      %s166 = smul.addr %s165, 4
      %s167 = scalar_lea.vmem %s0, %s166
      %p168 = pneg %p49
      %p169 = pneg %p46
      %p170 = pneg %p70
      %p171 = pneg %p67
      %p172 = pneg %p91
      %p173 = pneg %p88
      %p174 = pneg %p119
      %p175 = pneg %p116
      %p176 = scmp.lt.s32.totalorder %s19, 1
      %s177 = scalar_select %p176, %s19, 1
      %p178 = scmp.lt.s32.totalorder %s18, 0
      %s179 = scalar_select %p178, %s18, 0
      %s180 = smul.addr %s177, 3
      %s181 = sadd.s32 %s179, %s180
      %s182 = smul.addr %s181, 8
      %s183 = scalar_lea.vmem %s3, %s182
      %p184 = scmp.lt.s32.totalorder %s19, 1
      %s185 = scalar_select %p184, %s19, 1
      %p186 = scmp.lt.s32.totalorder %s18, 0
      %s187 = scalar_select %p186, %s18, 0
      %s188 = sadd.s32 %s187, %s185
      %s189 = smul.addr %s188, 4
      %s190 = scalar_lea.vmem %s0, %s189
      %p191 = scmp.lt.s32.totalorder %s19, 1
      %s192 = scalar_select %p191, %s19, 1
      %p193 = scmp.lt.s32.totalorder %s18, 0
      %s194 = scalar_select %p193, %s18, 0
      %s195 = smul.addr %s192, 3
      %s196 = sadd.s32 %s194, %s195
      %s197 = smul.addr %s196, 8
      %s198 = scalar_lea.vmem %s3, %s197
      %v200 = vld [vmem:[%s1] sm:$0xf]
      %v201 = vld [vmem:[%s1 + $0x4] sm:$0xf]
      %v202 = vld [vmem:[%s1 + $0x8] sm:$0xf]
      %v203 = vld [vmem:[%s190] sm:$0xf]
      %v204 = vld [vmem:[%s2] sm:$0xff]
      %v205 = vld [vmem:[%s2 + $0x8] sm:$0xff]
      %v206 = vld [vmem:[%s2 + $0x10] sm:$0xff]
      %208 = vset.pattern.permute.xlu0 0
      %209 = vperm.xlu0 %208, %v204
      %v210 = vpop.permute.xlu0 %209
      %213 = vset.pattern.permute.xlu0 0
      %214 = vperm.xlu0 %213, %v205
      %v215 = vpop.permute.xlu0 %214
      %218 = vset.pattern.permute.xlu0 0
      %219 = vperm.xlu0 %218, %v206
      %v220 = vpop.permute.xlu0 %219
      %v225 = vunpack.c.l.b16 %v200
      %v226 = vunpack.c.l.b16 %v201
      %v227 = vunpack.c.l.b16 %v202
      %v228 = vpack.c.b16 %v226, %v225
      %v229 = vpack.c.b16 %v227, %v227
      %vm230 = vcmask 64512
      %v232 = vsel %vm230, %v228, 0
      %v235 = vsel %vm230, %v229, 0
      %vm237 = vcmask 1043456
      %v239 = vsel %vm237, %v203, 0
      %241 = vmatprep.subr.bf16.mxu0 0
      %242 = vmatpush1.bf16.msra.mxu0 %v239
      %243 = vmatprep.subr.bf16.mxu0 0
      %244 = vmatpush1.bf16.msra.mxu0 0
      %245 = vmatprep.subr.bf16.mxu0 0
      %246 = vmatpush1.bf16.msra.mxu0 0
      %247 = vmatprep.subr.bf16.mxu0 0
      %248 = vmatpush1.bf16.msra.mxu0 0
      %249 = vmatprep.subr.bf16.mxu0 0
      %250 = vmatpush1.bf16.msra.mxu0 0
      %251 = vmatprep.subr.bf16.mxu0 0
      %252 = vmatpush1.bf16.msra.mxu0 0
      %253 = vmatprep.subr.bf16.mxu0 0
      %254 = vmatpush1.bf16.msra.mxu0 0
      %255 = vmatprep.subr.bf16.mxu0 0
      %256 = vmatpush1.bf16.msra.mxu0 0
      %257 = vmatprep.subr.bf16.mxu0 0
      %258 = vmatpush1.bf16.msra.mxu0 0
      %259 = vmatprep.subr.bf16.mxu0 0
      %260 = vmatpush1.bf16.msra.mxu0 0
      %261 = vmatprep.subr.bf16.mxu0 0
      %262 = vmatpush1.bf16.msra.mxu0 0
      %263 = vmatprep.subr.bf16.mxu0 0
      %264 = vmatpush1.bf16.msra.mxu0 0
      %265 = vmatprep.subr.bf16.mxu0 0
      %266 = vmatpush1.bf16.msra.mxu0 0
      %267 = vmatprep.subr.bf16.mxu0 0
      %268 = vmatpush1.bf16.msra.mxu0 0
      %269 = vmatprep.subr.bf16.mxu0 0
      %270 = vmatpush1.bf16.msra.mxu0 0
      %271 = vmatprep.subr.bf16.mxu0 0
      %272 = vmatpush1.bf16.msra.mxu0 0
      %273 = vmatprep.mubr.bf16.mxu0 0
      %274 = vmatmul.mubr.bf16.gmra.mrb[0].mxu0 %v232
      %v275 = vpop.f32.mrb[0].mxu0
      %v276 = vadd.f32 %v210, %v275
      %v277 = vpop.f32.mrb[0].mxu0
      %v278 = vpop.f32.mrb[0].mxu0
      %v279 = vadd.f32 %v215, %v278
      %v280 = vpop.f32.mrb[0].mxu0
      %281 = vmatprep.mubr.bf16.mxu0 0
      %282 = vmatmul.mubr.bf16.gmra.mrb[0].mxu0 %v235
      %v283 = vpop.f32.mrb[0].mxu0
      %v284 = vadd.f32 %v220, %v283
      %v285 = vpop.f32.mrb[0].mxu0
      %v286 = vpop.f32.mrb[0].mxu0
      %v287 = vpop.f32.mrb[0].mxu0
      %288 = vdwg.mxu0
      %vm289 = vcmask 130048
      %290 = vst.msk [vmem:[%s198] sm:$0xff] %vm289, %v276
      %291 = vst.msk [vmem:[%s198 + $0x8] sm:$0xff] %vm289, %v279
      %292 = vst.msk [vmem:[%s198 + $0x10] sm:$0xff] %vm289, %v284
      %p293 = scmp.lt.s32.totalorder %s19, 1
      %s294 = scalar_select %p293, %s19, 1
      %p295 = scmp.lt.s32.totalorder %s18, 0
      %s296 = scalar_select %p295, %s18, 0
      %s297 = smul.addr %s294, 3
      %s298 = sadd.s32 %s296, %s297
      %s299 = smul.addr %s298, 8
      %s300 = scalar_lea.vmem %s3, %s299
      // Predicated region
      $region33: #{tpu_custom_call.1} parent=31 // pred_check
        %p301 = pneg %p116
      $region34: #{tpu_custom_call.1} parent=31 // pred_check_branch
        %303 = sbr.rel (%p301) target = $region36
      $region35: #{tpu_custom_call.1} parent=31 // pred_region
        _
      $region36: #{tpu_custom_call.1} parent=31 // pred_fallthru
        _
    $region32: #{tpu_custom_call.1} parent=5 // pred_fallthru
      _
    %p304 = scmp.le.s32.totalorder 2, %s9
    // Predicated region
    $region37: #{tpu_custom_call.1} parent=5 // pred_check
      %p305 = pneg %p304
    $region38: #{tpu_custom_call.1} parent=5 // pred_check_branch
      %307 = sbr.rel (%p305) target = $region40
    $region39: #{tpu_custom_call.1} parent=5 // pred_region
      %s308 = ssub.s32 %s9, 2
      // Predicated region
      $region41: #{tpu_custom_call.1} parent=39 // pred_check
        %p309 = pneg %p122
      $region42: #{tpu_custom_call.1} parent=39 // pred_check_branch
        %311 = sbr.rel (%p309) target = $region44
      $region43: #{tpu_custom_call.1} parent=39 // pred_region
        %p312 = scmp.lt.s32.totalorder %s21, 1
        %s313 = scalar_select %p312, %s21, 1
        %p314 = scmp.lt.s32.totalorder %s20, 0
        %s315 = scalar_select %p314, %s20, 0
        %s316 = smul.addr %s313, 3
        %s317 = sadd.s32 %s315, %s316
        %s318 = smul.addr %s317, 8
        %s319 = scalar_lea.vmem %s3, %s318
      $region44: #{tpu_custom_call.1} parent=39 // pred_fallthru
        _
    $region40: #{tpu_custom_call.1} parent=5 // pred_fallthru
      _
  $region6: #{tpu_custom_call.1} parent=0 // loop_footer
    %s13 = sadd.s32 1, %s9
  $region7: #{tpu_custom_call.1} parent=0 // loop_footer_branch
    %8 = sbr.rel target = $region3
  $region8: #{tpu_custom_call.1} parent=0 // loop_exit
    _

</llo_original>
